<compile_context>
chip_gen: v6e
topology: v6e:2x2x1
jax: 0.10.0
libtpu: 0.0.40
codegen_flags: <defaults>
</compile_context>

<pallas_src>
import jax
import jax.numpy as jnp
from jax.experimental import pallas as pl
from jax.experimental.pallas import tpu as pltpu


def _fakenet3d_kernel(x_ref, mhw_ref, vp_ref, sel_ref, b_ref, out_ref, acc_ref):
    # x_ref:   (1, TR, H*W)   raw-x row tile (rows = (c, d), lanes = (h, w))
    # mhw_ref: (H*W, 9*CLS)   0/1 (kh,kw)-window masks, replicated per class
    # vp_ref:  (TR, 9*CLS)    folded per-row weights (conv_w, fc_w, d-window, 1/P)
    # sel_ref: (9*CLS, CLS)   groups the 9 shift columns of each class
    # b_ref:   (1, CLS)       folded bias (fc_w @ conv_b + fc_b)
    # out_ref: (1, 1, CLS)
    # acc_ref: (1, 9*CLS) f32 running partial sums across row tiles
    r = pl.program_id(1)

    @pl.when(r == 0)
    def _init():
        acc_ref[...] = jnp.zeros_like(acc_ref)

    # (kh, kw) window sums for every (c, d) row of the tile  -> MXU
    t1 = jnp.dot(x_ref[0], mhw_ref[...],
                 preferred_element_type=jnp.float32)                    # (TR, 9*CLS)
    # weight by folded per-row coefficients, reduce over the tile's rows -> VPU
    acc_ref[...] += jnp.sum(t1 * vp_ref[...], axis=0, keepdims=True)    # (1, 9*CLS)

    @pl.when(r == pl.num_programs(1) - 1)
    def _finalize():
        out_ref[0] = (jnp.dot(acc_ref[...], sel_ref[...],
                              preferred_element_type=jnp.float32)
                      + b_ref[...])


def _window_selector(n, n_out, ks, dtype):
    # sel[i, k] = 1  iff  input index i lies in the valid-conv window at offset k
    i = jnp.arange(n)[:, None]
    k = jnp.arange(ks)[None, :]
    return ((i >= k) & (i <= k + n_out - 1)).astype(dtype)


def fake_net3d_forward(x, params):
    conv_w, conv_b, fc_w, fc_b = params        # (OC,C,3,3,3), (OC,), (CLS,OC), (CLS,)
    B, C, D, H, W = x.shape
    KS = conv_w.shape[-1]
    CLS = fc_w.shape[0]
    Do, Ho, Wo = D - KS + 1, H - KS + 1, W - KS + 1
    P = Do * Ho * Wo
    HW, R, S2 = H * W, C * D, KS * KS
    NC = S2 * CLS
    f32 = jnp.float32

    # ---- layout-only prep on x: contiguous reshape, no data inflation ----
    x3 = x.astype(f32).reshape(B, R, HW)                      # rows = c*D + d

    # ---- input-independent weight / selector folding ("weight prep") ----
    sd = _window_selector(D, Do, KS, f32)                     # (D, KS)
    sh = _window_selector(H, Ho, KS, f32)                     # (H, KS)
    sw = _window_selector(W, Wo, KS, f32)                     # (W, KS)
    mhw = (sh[:, None, :, None] * sw[None, :, None, :]).reshape(HW, S2)
    mhw3 = jnp.concatenate([mhw] * CLS, axis=1)               # (HW, 9*CLS)

    # fold the FC into the conv weights, fold d-window membership and 1/P per row
    wc = jnp.einsum('ocklm,jo->cklmj', conv_w.astype(f32), fc_w.astype(f32))
    v = jnp.einsum('dk,cklmj->jcdlm', sd, wc) / P             # (CLS, C, D, KS, KS)
    vp = jnp.transpose(v.reshape(CLS, R, S2), (1, 0, 2)).reshape(R, NC)
    sel = jnp.repeat(jnp.eye(CLS, dtype=f32), S2, axis=0)     # (9*CLS, CLS)
    bcomb = (fc_w.astype(f32) @ conv_b.astype(f32)
             + fc_b.astype(f32)).reshape(1, CLS)

    # ---- row tiling for the reduction ("arbitrary") grid axis ----
    # Keeps the double-buffered x tile ~<=2 MiB so it stays inside VMEM on every
    # generation (incl. v7x's 64 MiB) for real CT volumes; at the toy size it also
    # exercises the multi-step accumulator path.
    divs = [t for t in range(8, R + 1, 8) if R % t == 0]
    if divs:
        tr_cap = max(8, ((2 << 20) // (HW * 4)) // 8 * 8)
        good = [t for t in divs if t <= min(tr_cap, max(8, R // 2))]
        TR = good[-1] if good else divs[0]
    else:
        TR = R                                                # full-dim block fallback
    nR = R // TR

    out = pl.pallas_call(
        _fakenet3d_kernel,
        out_shape=jax.ShapeDtypeStruct((B, 1, CLS), f32),
        grid_spec=pltpu.PrefetchScalarGridSpec(
            num_scalar_prefetch=0,
            grid=(B, nR),
            in_specs=[
                pl.BlockSpec((1, TR, HW), lambda b, r: (b, r, 0)),
                pl.BlockSpec((HW, NC), lambda b, r: (0, 0)),
                pl.BlockSpec((TR, NC), lambda b, r: (r, 0)),
                pl.BlockSpec((NC, CLS), lambda b, r: (0, 0)),
                pl.BlockSpec((1, CLS), lambda b, r: (0, 0)),
            ],
            out_specs=pl.BlockSpec((1, 1, CLS), lambda b, r: (b, 0, 0)),
            scratch_shapes=[pltpu.VMEM((1, NC), f32)],
        ),
        compiler_params=pltpu.CompilerParams(
            dimension_semantics=("parallel", "arbitrary")),
    )(x3, mhw3, vp, sel, bcomb)
    return out.reshape(B, CLS)


def fake_net3d_reference(x, params):
    """Pure-JAX reference matching PyTorch semantics (conv -> global avg -> fc)."""
    conv_w, conv_b, fc_w, fc_b = params
    out = jax.lax.conv_general_dilated(
        x, conv_w, window_strides=(1, 1, 1), padding="VALID",
        dimension_numbers=("NCDHW", "OIDHW", "NCDHW"))
    out = out + conv_b.reshape(1, -1, 1, 1, 1)
    out = out.mean(axis=(2, 3, 4))                  # AdaptiveAvgPool3d(1) + view(bs,-1)
    return out @ fc_w.T + fc_b


if __name__ == "__main__":
    key = jax.random.PRNGKey(0)
    kx, kcw, kcb, kfw, kfb = jax.random.split(key, 5)

    # Small shapes consistent with the module: c_in=4, 3x3x3 valid conv needs spatial > 3.
    B, C, D, H, W = 2, 4, 10, 10, 10
    OC, CLS, KS = 16, 3, 3

    x = jax.random.normal(kx, (B, C, D, H, W), jnp.float32)
    conv_w = 0.1 * jax.random.normal(kcw, (OC, C, KS, KS, KS), jnp.float32)
    conv_b = 0.1 * jax.random.normal(kcb, (OC,), jnp.float32)
    fc_w = 0.1 * jax.random.normal(kfw, (CLS, OC), jnp.float32)
    fc_b = 0.1 * jax.random.normal(kfb, (CLS,), jnp.float32)
    params = (conv_w, conv_b, fc_w, fc_b)

    out = jax.block_until_ready(fake_net3d_forward(x, params))
    ref = fake_net3d_reference(x, params)

    assert out.shape == (B, CLS), out.shape
    assert jnp.allclose(out, ref, rtol=1e-4, atol=1e-4), (out, ref)
    print("KERNEL_OK")
</pallas_src>

<mosaic_0001>
module attributes {stable_mosaic.version = 11 : i64} {
  func.func @_fakenet3d_kernel(%arg0: i32, %arg1: i32, %arg2: memref<1x8x100xf32, #tpu.memory_space<vmem>>, %arg3: memref<100x27xf32, #tpu.memory_space<vmem>>, %arg4: memref<8x27xf32, #tpu.memory_space<vmem>>, %arg5: memref<27x3xf32, #tpu.memory_space<vmem>>, %arg6: memref<1x3xf32, #tpu.memory_space<vmem>>, %arg7: memref<1x1x3xf32, #tpu.memory_space<vmem>>, %arg8: memref<1x27xf32, #tpu.memory_space<vmem>>) attributes {dimension_semantics = [#tpu.dimension_semantics<parallel>, #tpu.dimension_semantics<arbitrary>], iteration_bounds = array<i64: 2, 5>, scalar_prefetch = 0 : i64, scratch_operands = 1 : i64, tpu.core_type = #tpu.core_type<tc>, window_params = [{transform_indices = @transform_0, window_bounds = array<i64: 1, 8, 100>}, {pipeline_mode = #tpu.pipeline_mode<synchronous>, transform_indices = @transform_1, window_bounds = array<i64: 100, 27>}, {transform_indices = @transform_2, window_bounds = array<i64: 8, 27>}, {pipeline_mode = #tpu.pipeline_mode<synchronous>, transform_indices = @transform_3, window_bounds = array<i64: 27, 3>}, {pipeline_mode = #tpu.pipeline_mode<synchronous>, transform_indices = @transform_4, window_bounds = array<i64: 1, 3>}, {transform_indices = @transform_5, window_bounds = array<i64: 1, 1, 3>}]} {
    %c0_i32 = arith.constant 0 : i32
    %0 = arith.cmpi eq, %arg1, %c0_i32 : i32
    %1 = arith.extui %0 : i1 to i32
    %c0_i32_0 = arith.constant 0 : i32
    %2 = arith.cmpi ne, %1, %c0_i32_0 : i32
    scf.if %2 {
      %cst_13 = arith.constant 0.000000e+00 : f32
      %17 = vector.broadcast %cst_13 : f32 to vector<1x27xf32>
      %c0_14 = arith.constant 0 : index
      %c0_15 = arith.constant 0 : index
      %18 = vector.load %arg8[%c0_14, %c0_15] : memref<1x27xf32, #tpu.memory_space<vmem>>, vector<1x27xf32>
      tpu.vector_store %arg8[%c0_14, %c0_15], %17 {strides = array<i32>} : memref<1x27xf32, #tpu.memory_space<vmem>>, vector<1x27xf32>,
    } else {
    }
    %c0 = arith.constant 0 : index
    %c0_1 = arith.constant 0 : index
    %c0_2 = arith.constant 0 : index
    %3 = vector.load %arg2[%c0, %c0_1, %c0_2] : memref<1x8x100xf32, #tpu.memory_space<vmem>>, vector<1x8x100xf32>
    %4 = vector.shape_cast %3 : vector<1x8x100xf32> to vector<8x100xf32>
    %c0_3 = arith.constant 0 : index
    %c0_4 = arith.constant 0 : index
    %5 = vector.load %arg3[%c0_3, %c0_4] : memref<100x27xf32, #tpu.memory_space<vmem>>, vector<100x27xf32>
    %cst = arith.constant dense<0.000000e+00> : vector<8x27xf32>
    %6 = tpu.matmul %4, %5, %cst {dimension_numbers = #tpu.dot_dimension_numbers<[1], [0], [0], [1], [0, 0, 1, 1], [], []>} : vector<8x100xf32>, vector<100x27xf32>, vector<8x27xf32> -> vector<8x27xf32>
    %c0_5 = arith.constant 0 : index
    %c0_6 = arith.constant 0 : index
    %7 = vector.load %arg8[%c0_5, %c0_6] : memref<1x27xf32, #tpu.memory_space<vmem>>, vector<1x27xf32>
    %c0_7 = arith.constant 0 : index
    %c0_8 = arith.constant 0 : index
    %8 = vector.load %arg4[%c0_7, %c0_8] : memref<8x27xf32, #tpu.memory_space<vmem>>, vector<8x27xf32>
    %9 = arith.mulf %6, %8 : vector<8x27xf32>
    %cst_9 = arith.constant dense<0.000000e+00> : vector<27xf32>
    %10 = vector.multi_reduction <add>, %9, %cst_9 [0] : vector<8x27xf32> to vector<27xf32>
    %11 = vector.shape_cast %10 : vector<27xf32> to vector<1x27xf32>
    %12 = arith.addf %7, %11 : vector<1x27xf32>
    %c0_10 = arith.constant 0 : index
    %c0_11 = arith.constant 0 : index
    %13 = vector.load %arg8[%c0_10, %c0_11] : memref<1x27xf32, #tpu.memory_space<vmem>>, vector<1x27xf32>
    tpu.vector_store %arg8[%c0_10, %c0_11], %12 {strides = array<i32>} : memref<1x27xf32, #tpu.memory_space<vmem>>, vector<1x27xf32>,
    %c4_i32 = arith.constant 4 : i32
    %14 = arith.cmpi eq, %arg1, %c4_i32 : i32
    %15 = arith.extui %14 : i1 to i32
    %c0_i32_12 = arith.constant 0 : i32
    %16 = arith.cmpi ne, %15, %c0_i32_12 : i32
    scf.if %16 {
      %c0_13 = arith.constant 0 : index
      %c0_14 = arith.constant 0 : index
      %17 = vector.load %arg8[%c0_13, %c0_14] : memref<1x27xf32, #tpu.memory_space<vmem>>, vector<1x27xf32>
      %c0_15 = arith.constant 0 : index
      %c0_16 = arith.constant 0 : index
      %18 = vector.load %arg5[%c0_15, %c0_16] : memref<27x3xf32, #tpu.memory_space<vmem>>, vector<27x3xf32>
      %cst_17 = arith.constant dense<0.000000e+00> : vector<1x3xf32>
      %19 = tpu.matmul %17, %18, %cst_17 {dimension_numbers = #tpu.dot_dimension_numbers<[1], [0], [0], [1], [0, 0, 1, 1], [], []>} : vector<1x27xf32>, vector<27x3xf32>, vector<1x3xf32> -> vector<1x3xf32>
      %c0_18 = arith.constant 0 : index
      %c0_19 = arith.constant 0 : index
      %20 = vector.load %arg6[%c0_18, %c0_19] : memref<1x3xf32, #tpu.memory_space<vmem>>, vector<1x3xf32>
      %21 = arith.addf %19, %20 : vector<1x3xf32>
      %c0_20 = arith.constant 0 : index
      %c0_21 = arith.constant 0 : index
      %c0_22 = arith.constant 0 : index
      %22 = vector.load %arg7[%c0_20, %c0_21, %c0_22] : memref<1x1x3xf32, #tpu.memory_space<vmem>>, vector<1x1x3xf32>
      %23 = vector.shape_cast %22 : vector<1x1x3xf32> to vector<1x3xf32>
      %24 = vector.shape_cast %21 : vector<1x3xf32> to vector<1x1x3xf32>
      tpu.vector_store %arg7[%c0_20, %c0_21, %c0_22], %24 {strides = array<i32>} : memref<1x1x3xf32, #tpu.memory_space<vmem>>, vector<1x1x3xf32>,
    } else {
    }
    return
  }
  func.func @transform_0(%arg0: i32, %arg1: i32) -> (i32, i32, i32) {
    %c0_i32 = arith.constant 0 : i32
    %c0_i32_0 = arith.constant 0 : i32
    return %arg0, %arg1, %c0_i32 : i32, i32, i32
  }
  func.func @transform_1(%arg0: i32, %arg1: i32) -> (i32, i32) {
    %c0_i32 = arith.constant 0 : i32
    %c0_i32_0 = arith.constant 0 : i32
    %c0_i32_1 = arith.constant 0 : i32
    return %c0_i32, %c0_i32_0 : i32, i32
  }
  func.func @transform_2(%arg0: i32, %arg1: i32) -> (i32, i32) {
    %c0_i32 = arith.constant 0 : i32
    %c0_i32_0 = arith.constant 0 : i32
    return %arg1, %c0_i32 : i32, i32
  }
  func.func @transform_3(%arg0: i32, %arg1: i32) -> (i32, i32) {
    %c0_i32 = arith.constant 0 : i32
    %c0_i32_0 = arith.constant 0 : i32
    %c0_i32_1 = arith.constant 0 : i32
    return %c0_i32, %c0_i32_0 : i32, i32
  }
  func.func @transform_4(%arg0: i32, %arg1: i32) -> (i32, i32) {
    %c0_i32 = arith.constant 0 : i32
    %c0_i32_0 = arith.constant 0 : i32
    %c0_i32_1 = arith.constant 0 : i32
    return %c0_i32, %c0_i32_0 : i32, i32
  }
  func.func @transform_5(%arg0: i32, %arg1: i32) -> (i32, i32, i32) {
    %c0_i32 = arith.constant 0 : i32
    %c0_i32_0 = arith.constant 0 : i32
    %c0_i32_1 = arith.constant 0 : i32
    return %arg0, %c0_i32, %c0_i32_0 : i32, i32, i32
  }
}

</mosaic_0001>

<llo_original>
// kernel: tpu_custom_call.1
$region0: #{tpu_custom_call.1}
  #allocation0 [shape = 'u32[]', space=smem, size = 0x4, offset = 0x4, fixed_abs, tag = 'smem constant byte address 0x4 - core index']
  #allocation1 [shape = 'u32[144,128]{1,0:T(1,128)}', space=vmem, size = 0x12000, scoped, tag = 'internal scratch']
  #allocation2 [shape = 'f32[1,27]{1,0:T(1,128)}', space=vmem, size = 0x200, scoped, tag = 'scratch operand']
  %s0 = inlined_call_operand.vmem [shape: f32[2,40,100], index: 0, kind: input, shape index: {}]
  %s1 = inlined_call_operand.vmem [shape: f32[100,27], index: 1, kind: input, shape index: {}]
  %s2 = inlined_call_operand.vmem [shape: f32[40,27], index: 2, kind: input, shape index: {}]
  %s3 = inlined_call_operand.vmem [shape: f32[27,3], index: 3, kind: input, shape index: {}]
  %s4 = inlined_call_operand.vmem [shape: f32[1,3], index: 4, kind: input, shape index: {}]
  %s5 = inlined_call_operand.hbm [shape: f32[2,1,3], index: 5, kind: output, shape index: {}]
  %s6 = sld [smem:[#allocation0]]
  $region61: #{tpu_custom_call.1} parent=0
    _
  %s8 = ssub.s32 1, %s6
  %s9 = scalar_select 0, %s8, %s6
  $region1: #{tpu_custom_call.1} parent=0
    #allocation3 [shape = 'u8[1024]{0}', space=vmem, size = 0x400, scoped, tag = 'output window, operand 0']
    #allocation4 [shape = 's32[2]{0}', space=sflag, size = 0x8, scoped, tag = 'scoped memory for tpu_custom_call.1']
    %10 = vsyncpa [#allocation4], 0
    %s11 = scalar_lea.sflag [#allocation4], 1
    %12 = vsyncpa %s11, 0
    loop: start=0, step=1, limit=12
    $region2: #{tpu_custom_call.1} parent=1 // loop_pre_header
      _
    $region3: #{tpu_custom_call.1} parent=1 // loop_header
      %s14 = sphi 0, %s18
      %p15 = scmp.ge.s32.totalorder %s14, 12
      %s21 = sphi 0, %s33
      %s22 = sphi 0, %s29
      %s23 = sphi 0, %s21
      %s24 = sphi 0, %s22
      %s25 = sphi 0, %s23
      %s26 = sphi 0, %s24
      %s38 = sphi 0, %s40
      %s41 = sphi 0, %s38
      %s42 = sphi 0, %s41
      %s58 = sphi 0, %s42
      %s62 = sphi 0, %s62
      %s64 = sphi 0, %s62
      %s65 = sphi 0, %s64
      %s79 = sphi 0, %s65
      %s85 = sphi 0, %s87
      %s88 = sphi 0, %s85
      %s89 = sphi 0, %s88
      %s105 = sphi 0, %s89
      %s109 = sphi 0, %s109
      %s111 = sphi 0, %s109
      %s112 = sphi 0, %s111
      %s126 = sphi 0, %s112
      %s130 = sphi 0, %s130
      %s132 = sphi 0, %s130
      %s133 = sphi 0, %s132
      %s147 = sphi 0, %s133
      %s153 = sphi 0, %s155
      %s156 = sphi 0, %s153
      %s157 = sphi 0, %s156
      %s173 = sphi 0, %s157
    $region4: #{tpu_custom_call.1} parent=1 // loop_header_branch
      %17 = sbr.rel (%p15) target = $region8
    $region5: #{tpu_custom_call.1} parent=1 // loop_body
      %s19 = ssub.s32 %s14, 1
      %s20 = ssub.s32 %s14, 2
      %s27 = sadd.s32 1, %s22
      %p28 = scmp.ge.s32.totalorder %s27, 5
      %s29 = scalar_select %p28, 0, %s27
      %s30 = sadd.s32 1, %s21
      %s31 = scalar_select %p28, %s30, %s21
      %p32 = scmp.ge.s32.totalorder %s31, 2
      %s33 = scalar_select %p32, 0, %s31
      %s34 = ssub.s32 %s21, %s33
      %s35 = ssub.s32 %s22, %s29
      %s36 = sor.u32 %s34, %s35
      %p37 = scmp.eq.s32.totalorder %s36, 0
      %s39 = sadd.s32 %s38, 1
      %s40 = scalar_select %p37, %s38, %s39
      %p43 = pneg %p37
      %p44 = scmp.eq.s32.totalorder %s14, 9
      %p45 = por %p43, %p44
      %p46 = scmp.ne.s32.totalorder %s38, %s41
      %p47 = scmp.eq.s32.totalorder %s14, 0
      %p48 = por %p46, %p47
      %p49 = scmp.ne.s32.totalorder %s38, %s41
      %p50 = scmp.eq.s32.totalorder %s19, 9
      %p51 = por %p49, %p50
      %p52 = scmp.ne.s32.totalorder %s41, %s42
      %p53 = scmp.eq.s32.totalorder %s19, 0
      %p54 = por %p52, %p53
      %p55 = scmp.ne.s32.totalorder %s41, %s42
      %p56 = scmp.eq.s32.totalorder %s20, 9
      %p57 = por %p55, %p56
      %p59 = scmp.ne.s32.totalorder %s42, %s58
      %p60 = scmp.eq.s32.totalorder %s20, 0
      %p61 = por %p59, %p60
      %s63 = sadd.s32 %s62, 1
      %p66 = scmp.eq.s32.totalorder %s14, 9
      %p67 = scmp.ne.s32.totalorder %s62, %s64
      %p68 = scmp.eq.s32.totalorder %s14, 0
      %p69 = por %p67, %p68
      %p70 = scmp.ne.s32.totalorder %s62, %s64
      %p71 = scmp.eq.s32.totalorder %s19, 9
      %p72 = por %p70, %p71
      %p73 = scmp.ne.s32.totalorder %s64, %s65
      %p74 = scmp.eq.s32.totalorder %s19, 0
      %p75 = por %p73, %p74
      %p76 = scmp.ne.s32.totalorder %s64, %s65
      %p77 = scmp.eq.s32.totalorder %s20, 9
      %p78 = por %p76, %p77
      %p80 = scmp.ne.s32.totalorder %s65, %s79
      %p81 = scmp.eq.s32.totalorder %s20, 0
      %p82 = por %p80, %p81
      %s83 = ssub.s32 %s22, %s29
      %p84 = scmp.eq.s32.totalorder %s83, 0
      %s86 = sadd.s32 %s85, 1
      %s87 = scalar_select %p84, %s85, %s86
      %p90 = pneg %p84
      %p91 = scmp.eq.s32.totalorder %s14, 9
      %p92 = por %p90, %p91
      %p93 = scmp.ne.s32.totalorder %s85, %s88
      %p94 = scmp.eq.s32.totalorder %s14, 0
      %p95 = por %p93, %p94
      %p96 = scmp.ne.s32.totalorder %s85, %s88
      %p97 = scmp.eq.s32.totalorder %s19, 9
      %p98 = por %p96, %p97
      %p99 = scmp.ne.s32.totalorder %s88, %s89
      %p100 = scmp.eq.s32.totalorder %s19, 0
      %p101 = por %p99, %p100
      %p102 = scmp.ne.s32.totalorder %s88, %s89
      %p103 = scmp.eq.s32.totalorder %s20, 9
      %p104 = por %p102, %p103
      %p106 = scmp.ne.s32.totalorder %s89, %s105
      %p107 = scmp.eq.s32.totalorder %s20, 0
      %p108 = por %p106, %p107
      %s110 = sadd.s32 %s109, 1
      %p113 = scmp.eq.s32.totalorder %s14, 9
      %p114 = scmp.ne.s32.totalorder %s109, %s111
      %p115 = scmp.eq.s32.totalorder %s14, 0
      %p116 = por %p114, %p115
      %p117 = scmp.ne.s32.totalorder %s109, %s111
      %p118 = scmp.eq.s32.totalorder %s19, 9
      %p119 = por %p117, %p118
      %p120 = scmp.ne.s32.totalorder %s111, %s112
      %p121 = scmp.eq.s32.totalorder %s19, 0
      %p122 = por %p120, %p121
      %p123 = scmp.ne.s32.totalorder %s111, %s112
      %p124 = scmp.eq.s32.totalorder %s20, 9
      %p125 = por %p123, %p124
      %p127 = scmp.ne.s32.totalorder %s112, %s126
      %p128 = scmp.eq.s32.totalorder %s20, 0
      %p129 = por %p127, %p128
      %s131 = sadd.s32 %s130, 1
      %p134 = scmp.eq.s32.totalorder %s14, 9
      %p135 = scmp.ne.s32.totalorder %s130, %s132
      %p136 = scmp.eq.s32.totalorder %s14, 0
      %p137 = por %p135, %p136
      %p138 = scmp.ne.s32.totalorder %s130, %s132
      %p139 = scmp.eq.s32.totalorder %s19, 9
      %p140 = por %p138, %p139
      %p141 = scmp.ne.s32.totalorder %s132, %s133
      %p142 = scmp.eq.s32.totalorder %s19, 0
      %p143 = por %p141, %p142
      %p144 = scmp.ne.s32.totalorder %s132, %s133
      %p145 = scmp.eq.s32.totalorder %s20, 9
      %p146 = por %p144, %p145
      %p148 = scmp.ne.s32.totalorder %s133, %s147
      %p149 = scmp.eq.s32.totalorder %s20, 0
      %p150 = por %p148, %p149
      %s151 = ssub.s32 %s21, %s33
      %p152 = scmp.eq.s32.totalorder %s151, 0
      %s154 = sadd.s32 %s153, 1
      %s155 = scalar_select %p152, %s153, %s154
      %p158 = pneg %p152
      %p159 = scmp.eq.s32.totalorder %s14, 9
      %p160 = por %p158, %p159
      %p161 = scmp.ne.s32.totalorder %s153, %s156
      %p162 = scmp.eq.s32.totalorder %s14, 0
      %p163 = por %p161, %p162
      %p164 = scmp.ne.s32.totalorder %s153, %s156
      %p165 = scmp.eq.s32.totalorder %s19, 9
      %p166 = por %p164, %p165
      %p167 = scmp.ne.s32.totalorder %s156, %s157
      %p168 = scmp.eq.s32.totalorder %s19, 0
      %p169 = por %p167, %p168
      %p170 = scmp.ne.s32.totalorder %s156, %s157
      %p171 = scmp.eq.s32.totalorder %s20, 9
      %p172 = por %p170, %p171
      %p174 = scmp.ne.s32.totalorder %s157, %s173
      %p175 = scmp.eq.s32.totalorder %s20, 0
      %p176 = por %p174, %p175
      %p177 = scmp.le.s32.totalorder 1, %s14
      %p178 = scmp.lt.s32.totalorder %s14, 11
      %p179 = pnand %p177, %p178
      %p180 = pneg %p179
      // Predicated region
      $region9: #{tpu_custom_call.1} parent=5 // pred_check
        _
      $region10: #{tpu_custom_call.1} parent=5 // pred_check_branch
        %182 = sbr.rel (%p179) target = $region12
      $region11: #{tpu_custom_call.1} parent=5 // pred_region
        %s183 = ssub.s32 %s14, 1
        // Predicated region
        $region13: #{tpu_custom_call.1} parent=11 // pred_check
          %p184 = pneg %p75
        $region14: #{tpu_custom_call.1} parent=11 // pred_check_branch
          %186 = sbr.rel (%p184) target = $region16
        $region15: #{tpu_custom_call.1} parent=11 // pred_region
          _
        $region16: #{tpu_custom_call.1} parent=11 // pred_fallthru
          _
        // Predicated region
        $region17: #{tpu_custom_call.1} parent=11 // pred_check
          %p187 = pneg %p122
        $region18: #{tpu_custom_call.1} parent=11 // pred_check_branch
          %189 = sbr.rel (%p187) target = $region20
        $region19: #{tpu_custom_call.1} parent=11 // pred_region
          _
        $region20: #{tpu_custom_call.1} parent=11 // pred_fallthru
          _
        // Predicated region
        $region21: #{tpu_custom_call.1} parent=11 // pred_check
          %p190 = pneg %p143
        $region22: #{tpu_custom_call.1} parent=11 // pred_check_branch
          %192 = sbr.rel (%p190) target = $region24
        $region23: #{tpu_custom_call.1} parent=11 // pred_region
          _
        $region24: #{tpu_custom_call.1} parent=11 // pred_fallthru
          _
      $region12: #{tpu_custom_call.1} parent=5 // pred_fallthru
        _
      %p193 = scmp.lt.s32.totalorder %s14, 10
      // Predicated region
      $region25: #{tpu_custom_call.1} parent=5 // pred_check
        %p194 = pneg %p193
      $region26: #{tpu_custom_call.1} parent=5 // pred_check_branch
        %196 = sbr.rel (%p194) target = $region28
      $region27: #{tpu_custom_call.1} parent=5 // pred_region
        // Predicated region
        $region29: #{tpu_custom_call.1} parent=27 // pred_check
          %p197 = pneg %p48
        $region30: #{tpu_custom_call.1} parent=27 // pred_check_branch
          %199 = sbr.rel (%p197) target = $region32
        $region31: #{tpu_custom_call.1} parent=27 // pred_region
          %p200 = scmp.lt.s32.totalorder %s21, 1
          %s201 = scalar_select %p200, %s21, 1
          %p202 = scmp.lt.s32.totalorder %s22, 4
          %s203 = scalar_select %p202, %s22, 4
          %s204 = smul.addr %s201, 5
          %s205 = sadd.s32 %s203, %s204
          %s206 = smul.addr %s205, 8
          %s207 = scalar_lea.vmem %s0, %s206
        $region32: #{tpu_custom_call.1} parent=27 // pred_fallthru
          _
        // Predicated region
        $region33: #{tpu_custom_call.1} parent=27 // pred_check
          %p208 = pneg %p95
        $region34: #{tpu_custom_call.1} parent=27 // pred_check_branch
          %210 = sbr.rel (%p208) target = $region36
        $region35: #{tpu_custom_call.1} parent=27 // pred_region
          %p211 = scmp.lt.s32.totalorder %s22, 4
          %s212 = scalar_select %p211, %s22, 4
          %s213 = smul.addr %s212, 8
          %s214 = scalar_lea.vmem %s2, %s213
        $region36: #{tpu_custom_call.1} parent=27 // pred_fallthru
          _
      $region28: #{tpu_custom_call.1} parent=5 // pred_fallthru
        _
      %p215 = scmp.le.s32.totalorder 1, %s14
      %p216 = scmp.lt.s32.totalorder %s14, 11
      %p217 = pnand %p215, %p216
      %p218 = pneg %p217
      // Predicated region
      $region37: #{tpu_custom_call.1} parent=5 // pred_check
        _
      $region38: #{tpu_custom_call.1} parent=5 // pred_check_branch
        %220 = sbr.rel (%p217) target = $region40
      $region39: #{tpu_custom_call.1} parent=5 // pred_region
        %s221 = ssub.s32 %s14, 1
        %p222 = scmp.lt.s32.totalorder %s23, 1
        %s223 = scalar_select %p222, %s23, 1
        %p224 = scmp.lt.s32.totalorder %s24, 4
        %s225 = scalar_select %p224, %s24, 4
        %s226 = smul.addr %s223, 5
        %s227 = sadd.s32 %s225, %s226
        %s228 = smul.addr %s227, 8
        %s229 = scalar_lea.vmem %s0, %s228
        %p230 = pneg %p54
        %p231 = pneg %p51
        %p232 = pneg %p75
        %p233 = pneg %p72
        %p234 = scmp.lt.s32.totalorder %s24, 4
        %s235 = scalar_select %p234, %s24, 4
        %s236 = smul.addr %s235, 8
        %s237 = scalar_lea.vmem %s2, %s236
        %p238 = pneg %p101
        %p239 = pneg %p98
        %p240 = pneg %p122
        %p241 = pneg %p119
        %p242 = pneg %p143
        %p243 = pneg %p140
        %p244 = pneg %p169
        %p245 = pneg %p166
        %s246 = sand.u32 %s156, 1
        %s247 = scalar_lea.sflag [#allocation4], %s246
        %s248 = sand.u32 %s156, 1
        %s249 = scalar_lea.vmem [#allocation3], %s248
        %p250 = scmp.lt.s32.totalorder %s23, 1
        %s251 = scalar_select %p250, %s23, 1
        %p252 = scmp.lt.s32.totalorder %s24, 4
        %s253 = scalar_select %p252, %s24, 4
        %s254 = smul.addr %s251, 5
        %s255 = sadd.s32 %s253, %s254
        %s256 = smul.addr %s255, 8
        %s257 = scalar_lea.vmem %s0, %s256
        %p258 = scmp.lt.s32.totalorder %s24, 4
        %s259 = scalar_select %p258, %s24, 4
        %s260 = smul.addr %s259, 8
        %s261 = scalar_lea.vmem %s2, %s260
        %p262 = scmp.eq.s32.totalorder %s24, 0
        // Predicated region
        $region41: #{tpu_custom_call.1} parent=39 // pred_check
          %p263 = pneg %p262
        $region42: #{tpu_custom_call.1} parent=39 // pred_check_branch
          %265 = sbr.rel (%p263) target = $region44
        $region43: #{tpu_custom_call.1} parent=39 // pred_region
          %vm266 = vcmask 212992
          %267 = vst.msk [vmem:[#allocation2] sm:$0x1] %vm266, 0.0
        $region44: #{tpu_custom_call.1} parent=39 // pred_fallthru
          _
        %v268 = vld [vmem:[%s257] sm:$0xff]
        %v269 = vld [vmem:[%s1] sm:$0xff]
        %v270 = vld [vmem:[%s1 + $0x8] sm:$0xff]
        %v271 = vld [vmem:[%s1 + $0x10] sm:$0xff]
        %v272 = vld [vmem:[%s1 + $0x18] sm:$0xff]
        %v273 = vld [vmem:[%s1 + $0x20] sm:$0xff]
        %v274 = vld [vmem:[%s1 + $0x28] sm:$0xff]
        %v275 = vld [vmem:[%s1 + $0x30] sm:$0xff]
        %v276 = vld [vmem:[%s1 + $0x38] sm:$0xff]
        %v277 = vld [vmem:[%s1 + $0x40] sm:$0xff]
        %v278 = vld [vmem:[%s1 + $0x48] sm:$0xff]
        %v279 = vld [vmem:[%s1 + $0x50] sm:$0xff]
        %v280 = vld [vmem:[%s1 + $0x58] sm:$0xff]
        %v281 = vld [vmem:[%s1 + $0x60] sm:$0xf]
        %vm282 = vcmask 818176
        %v284 = vsel %vm282, %v268, 0
        %vm286 = vcmask 1043456
        %v288 = vsel %vm286, %v281, 0
        %290 = vmatprep.subr.mxu0 0.0
        %291 = vmatpush1.msra.mxu0 0.0
        %292 = vmatprep.subr.mxu0 0.0
        %293 = vmatpush1.msra.mxu0 0.0
        %294 = vmatprep.subr.mxu0 0.0
        %295 = vmatpush1.msra.mxu0 0.0
        %296 = vmatprep.subr.mxu0 0.0
        %297 = vmatpush1.msra.mxu0 %v288
        %298 = vmatprep.subr.mxu0 0.0
        %299 = vmatpush1.msra.mxu0 %v280
        %300 = vmatprep.subr.mxu0 0.0
        %301 = vmatpush1.msra.mxu0 %v279
        %302 = vmatprep.subr.mxu0 0.0
        %303 = vmatpush1.msra.mxu0 %v278
        %304 = vmatprep.subr.mxu0 0.0
        %305 = vmatpush1.msra.mxu0 %v277
        %306 = vmatprep.subr.mxu0 0.0
        %307 = vmatpush1.msra.mxu0 %v276
        %308 = vmatprep.subr.mxu0 0.0
        %309 = vmatpush1.msra.mxu0 %v275
        %310 = vmatprep.subr.mxu0 0.0
        %311 = vmatpush1.msra.mxu0 %v274
        %312 = vmatprep.subr.mxu0 0.0
        %313 = vmatpush1.msra.mxu0 %v273
        %314 = vmatprep.subr.mxu0 0.0
        %315 = vmatpush1.msra.mxu0 %v272
        %316 = vmatprep.subr.mxu0 0.0
        %317 = vmatpush1.msra.mxu0 %v271
        %318 = vmatprep.subr.mxu0 0.0
        %319 = vmatpush1.msra.mxu0 %v270
        %320 = vmatprep.subr.mxu0 0.0
        %321 = vmatpush1.msra.mxu0 %v269
        %322 = vmatprep.subr.mxu0 0.0
        %323 = vmatpush2.msra.mxu0 0.0
        %324 = vmatprep.subr.mxu0 0.0
        %325 = vmatpush2.msra.mxu0 0.0
        %326 = vmatprep.subr.mxu0 0.0
        %327 = vmatpush2.msra.mxu0 0.0
        %328 = vmatprep.subr.mxu0 0.0
        %329 = vmatpush2.msra.mxu0 0.0
        %330 = vmatprep.subr.mxu0 0.0
        %331 = vmatpush2.msra.mxu0 0.0
        %332 = vmatprep.subr.mxu0 0.0
        %333 = vmatpush2.msra.mxu0 0.0
        %334 = vmatprep.subr.mxu0 0.0
        %335 = vmatpush2.msra.mxu0 0.0
        %336 = vmatprep.subr.mxu0 0.0
        %337 = vmatpush2.msra.mxu0 0.0
        %338 = vmatprep.subr.mxu0 0.0
        %339 = vmatpush2.msra.mxu0 0.0
        %340 = vmatprep.subr.mxu0 0.0
        %341 = vmatpush2.msra.mxu0 0.0
        %342 = vmatprep.subr.mxu0 0.0
        %343 = vmatpush2.msra.mxu0 0.0
        %344 = vmatprep.subr.mxu0 0.0
        %345 = vmatpush2.msra.mxu0 0.0
        %346 = vmatprep.subr.mxu0 0.0
        %347 = vmatpush2.msra.mxu0 0.0
        %348 = vmatprep.subr.mxu0 0.0
        %349 = vmatpush2.msra.mxu0 0.0
        %350 = vmatprep.subr.mxu0 0.0
        %351 = vmatpush2.msra.mxu0 0.0
        %352 = vmatprep.subr.mxu0 0.0
        %353 = vmatpush2.msra.mxu0 0.0
        %354 = vmatprep.mubr.f32.mxu0 0.0
        %355 = vmatmul.mubr.f32.gmra.mxu0 %v284
        %v356 = vpop.f32.mrf.mxu0
        %v357 = vadd.f32 0.0, %v356
        %v358 = vpop.f32.mrf.mxu0
        %359 = vdwg.mxu0
        %v360 = vld [vmem:[#allocation2] sm:$0x1]
        %v361 = vld [vmem:[%s261] sm:$0xff]
        %v362 = vmul.f32 %v357, %v361
        %vm363 = vcmask 220160
        %v364 = vsel %vm363, %v362, 0.0
        %v365 = vrot.slane %v364, 4
        %v366 = vadd.f32 %v364, %v365
        %v367 = vrot.slane %v366, 2
        %v368 = vadd.f32 %v366, %v367
        %v369 = vrot.slane %v368, 1
        %v370 = vadd.f32 %v368, %v369
        %v371 = vadd.f32 %v360, %v370
        %vm372 = vcmask 212992
        %373 = vst.msk [vmem:[#allocation2] sm:$0x1] %vm372, %v371
        %p374 = scmp.eq.s32.totalorder %s24, 4
        // Predicated region
        $region45: #{tpu_custom_call.1} parent=39 // pred_check
          %p375 = pneg %p374
        $region46: #{tpu_custom_call.1} parent=39 // pred_check_branch
          %377 = sbr.rel (%p375) target = $region48
        $region47: #{tpu_custom_call.1} parent=39 // pred_region
          %v378 = vld [vmem:[#allocation2] sm:$0x1]
          %v379 = vld [vmem:[%s3] sm:$0xff]
          %v380 = vld [vmem:[%s3 + $0x8] sm:$0xff]
          %v381 = vld [vmem:[%s3 + $0x10] sm:$0xff]
          %v382 = vld [vmem:[%s3 + $0x18] sm:$0x7]
          %v383 = vld [vmem:[%s4] sm:$0x1]
          %v385 = vsel %vm363, %v378, 0
          %vm387 = vcmask 1042432
          %v389 = vsel %vm387, %v382, 0
          %391 = vmatprep.subr.mxu0 0.0
          %392 = vmatpush1.msra.mxu0 0.0
          %393 = vmatprep.subr.mxu0 0.0
          %394 = vmatpush1.msra.mxu0 0.0
          %395 = vmatprep.subr.mxu0 0.0
          %396 = vmatpush1.msra.mxu0 0.0
          %397 = vmatprep.subr.mxu0 0.0
          %398 = vmatpush1.msra.mxu0 0.0
          %399 = vmatprep.subr.mxu0 0.0
          %400 = vmatpush1.msra.mxu0 0.0
          %401 = vmatprep.subr.mxu0 0.0
          %402 = vmatpush1.msra.mxu0 0.0
          %403 = vmatprep.subr.mxu0 0.0
          %404 = vmatpush1.msra.mxu0 0.0
          %405 = vmatprep.subr.mxu0 0.0
          %406 = vmatpush1.msra.mxu0 0.0
          %407 = vmatprep.subr.mxu0 0.0
          %408 = vmatpush1.msra.mxu0 0.0
          %409 = vmatprep.subr.mxu0 0.0
          %410 = vmatpush1.msra.mxu0 0.0
          %411 = vmatprep.subr.mxu0 0.0
          %412 = vmatpush1.msra.mxu0 0.0
          %413 = vmatprep.subr.mxu0 0.0
          %414 = vmatpush1.msra.mxu0 0.0
          %415 = vmatprep.subr.mxu0 0.0
          %416 = vmatpush1.msra.mxu0 %v389
          %417 = vmatprep.subr.mxu0 0.0
          %418 = vmatpush1.msra.mxu0 %v381
          %419 = vmatprep.subr.mxu0 0.0
          %420 = vmatpush1.msra.mxu0 %v380
          %421 = vmatprep.subr.mxu0 0.0
          %422 = vmatpush1.msra.mxu0 %v379
          %423 = vmatprep.subr.mxu0 0.0
          %424 = vmatpush2.msra.mxu0 0.0
          %425 = vmatprep.subr.mxu0 0.0
          %426 = vmatpush2.msra.mxu0 0.0
          %427 = vmatprep.subr.mxu0 0.0
          %428 = vmatpush2.msra.mxu0 0.0
          %429 = vmatprep.subr.mxu0 0.0
          %430 = vmatpush2.msra.mxu0 0.0
          %431 = vmatprep.subr.mxu0 0.0
          %432 = vmatpush2.msra.mxu0 0.0
          %433 = vmatprep.subr.mxu0 0.0
          %434 = vmatpush2.msra.mxu0 0.0
          %435 = vmatprep.subr.mxu0 0.0
          %436 = vmatpush2.msra.mxu0 0.0
          %437 = vmatprep.subr.mxu0 0.0
          %438 = vmatpush2.msra.mxu0 0.0
          %439 = vmatprep.subr.mxu0 0.0
          %440 = vmatpush2.msra.mxu0 0.0
          %441 = vmatprep.subr.mxu0 0.0
          %442 = vmatpush2.msra.mxu0 0.0
          %443 = vmatprep.subr.mxu0 0.0
          %444 = vmatpush2.msra.mxu0 0.0
          %445 = vmatprep.subr.mxu0 0.0
          %446 = vmatpush2.msra.mxu0 0.0
          %447 = vmatprep.subr.mxu0 0.0
          %448 = vmatpush2.msra.mxu0 0.0
          %449 = vmatprep.subr.mxu0 0.0
          %450 = vmatpush2.msra.mxu0 0.0
          %451 = vmatprep.subr.mxu0 0.0
          %452 = vmatpush2.msra.mxu0 0.0
          %453 = vmatprep.subr.mxu0 0.0
          %454 = vmatpush2.msra.mxu0 0.0
          %455 = vmatprep.mubr.f32.mxu0 0.0
          %456 = vmatmul.mubr.f32.gmra.mxu0 %v385
          %v457 = vpop.f32.mrf.mxu0
          %v458 = vadd.f32 %v383, %v457
          %v459 = vpop.f32.mrf.mxu0
          %460 = vdwg.mxu0
          %vm461 = vcmask 16384
          %462 = vst.msk [vmem:[%s249] sm:$0x1] %vm461, %v458
        $region48: #{tpu_custom_call.1} parent=39 // pred_fallthru
          _
        %s463 = sand.u32 %s156, 1
        %s464 = scalar_lea.sflag [#allocation4], %s463
        %s465 = sand.u32 %s156, 1
        %s466 = scalar_lea.vmem [#allocation3], %s465
        // Predicated region
        $region49: #{tpu_custom_call.1} parent=39 // pred_check
          %p467 = pneg %p166
        $region50: #{tpu_custom_call.1} parent=39 // pred_check_branch
          %469 = sbr.rel (%p467) target = $region52
        $region51: #{tpu_custom_call.1} parent=39 // pred_region
          %s471 = ssub.s32 16, 16
          %472 = vsyncadd %s464, %s471
          %s473 = smul.addr %s23, 16
          %s474 = scalar_lea.hbm %s5, %s473
          %s476 = sshll.u32 %s466, 4
          %s477 = int_to_ptr.vmem [resolvable:$true] %s476
          %479 = dma.vmem_to_hbm [thread:$0]  %s477, 16, %s474, %s464
        $region52: #{tpu_custom_call.1} parent=39 // pred_fallthru
          _
      $region40: #{tpu_custom_call.1} parent=5 // pred_fallthru
        _
      %p480 = scmp.le.s32.totalorder 2, %s14
      // Predicated region
      $region53: #{tpu_custom_call.1} parent=5 // pred_check
        %p481 = pneg %p480
      $region54: #{tpu_custom_call.1} parent=5 // pred_check_branch
        %483 = sbr.rel (%p481) target = $region56
      $region55: #{tpu_custom_call.1} parent=5 // pred_region
        %s484 = ssub.s32 %s14, 2
        // Predicated region
        $region57: #{tpu_custom_call.1} parent=55 // pred_check
          %p485 = pneg %p172
        $region58: #{tpu_custom_call.1} parent=55 // pred_check_branch
          %487 = sbr.rel (%p485) target = $region60
        $region59: #{tpu_custom_call.1} parent=55 // pred_region
          %s488 = sand.u32 %s157, 1
          %s489 = scalar_lea.sflag [#allocation4], %s488
          %s490 = sand.u32 %s157, 1
          %s491 = scalar_lea.vmem [#allocation3], %s490
          %492 = dma.done %s489, 16
        $region60: #{tpu_custom_call.1} parent=55 // pred_fallthru
          _
      $region56: #{tpu_custom_call.1} parent=5 // pred_fallthru
        _
    $region6: #{tpu_custom_call.1} parent=1 // loop_footer
      %s18 = sadd.s32 1, %s14
    $region7: #{tpu_custom_call.1} parent=1 // loop_footer_branch
      %13 = sbr.rel target = $region3
    $region8: #{tpu_custom_call.1} parent=1 // loop_exit
      _
    %493 = vsyncpa [#allocation4], 1
    %s494 = scalar_lea.sflag [#allocation4], 1
    %495 = vsyncpa %s494, 1

</llo_original>
